<compile_context>
chip_gen: v7x
topology: tpu7x:2x2x1
jax: 0.10.0
libtpu: 0.0.40
codegen_flags: <defaults>
</compile_context>

<pallas_src>
import jax
import jax.numpy as jnp
from jax.experimental import pallas as pl
from jax.experimental.pallas import tpu as pltpu

_LANE = 128                          # TPU lane width
_MAX_BLOCK_BYTES = 2 * 1024 * 1024   # per-buffer tile budget (~8 MiB live with
                                     # double-buffered input + output blocks)


def _copy_kernel(x_ref, o_ref):
    # Pure HBM-bandwidth-bound identity copy of one lane-dense tile.
    o_ref[...] = x_ref[...]


def _squeezed_shape(shape):
    # Exact torch.squeeze semantics: drop every size-1 dim.
    return tuple(d for d in shape if d != 1)


def squeezer_forward(x: jax.Array) -> jax.Array:
    """Pallas implementation of Squeezer.forward (torch.squeeze)."""
    squeezed = _squeezed_shape(x.shape)
    total = x.size

    # Squeeze is metadata-only; for empty, tiny (< one (8,128) tile) or
    # non-128-divisible element counts a copy kernel is pure overhead, so we
    # return the zero-cost reshape directly.
    if total == 0 or total < 8 * _LANE or total % _LANE != 0:
        return jnp.reshape(x, squeezed)

    # Lane-dense 2D view: make the last (lane) dim the largest multiple of 128
    # that divides the element count so every store is a full, unmasked vst.
    lane = _LANE
    for cand in (1024, 512, 256, 128):
        if total % cand == 0:
            lane = cand
            break
    rows = total // lane
    x2d = x.reshape(rows, lane)

    # Row-tile sizing: largest multiple of the sublane tile that keeps one
    # block under ~2 MiB (sweet spot for the HBM roofline, fits every
    # generation's scoped VMEM with double buffering).
    itemsize = jnp.dtype(x.dtype).itemsize
    sublane = max(8, 32 // itemsize)          # 8 for f32, 16 for bf16, 32 for int8
    tm_cap = max(sublane,
                 (_MAX_BLOCK_BYTES // (lane * itemsize)) // sublane * sublane)
    tm = rows if rows <= tm_cap else tm_cap
    grid = (pl.cdiv(rows, tm),)

    out2d = pl.pallas_call(
        _copy_kernel,
        out_shape=jax.ShapeDtypeStruct((rows, lane), x.dtype),
        grid=grid,
        in_specs=[pl.BlockSpec((tm, lane), lambda i: (i, 0))],
        out_specs=pl.BlockSpec((tm, lane), lambda i: (i, 0)),
        compiler_params=pltpu.CompilerParams(
            # Row tiles are independent: lets v7x shard the grid across its
            # two TensorCores; neutral on v5e/v6e (single TC).
            dimension_semantics=("parallel",),
            # Explicit headroom (live blocks are only ~8 MiB, well inside the
            # v5e 16 MiB / v6e+v7x 32 MiB scoped defaults).
            vmem_limit_bytes=32 * 1024 * 1024,
        ),
    )(x2d)

    # Metadata-only squeeze of the kernel output.
    return out2d.reshape(squeezed)


if __name__ == "__main__":
    key = jax.random.PRNGKey(0)
    k1, k2 = jax.random.split(key)

    # Primary: NCHW-style input with a size-1 channel dim -> squeezed (2,16,128).
    x1 = jax.random.normal(k1, (2, 1, 16, 128), dtype=jnp.float32)
    y1 = squeezer_forward(x1)
    jax.block_until_ready(y1)
    ref1 = jnp.squeeze(x1)
    assert y1.shape == ref1.shape == (2, 16, 128), y1.shape
    assert y1.dtype == x1.dtype
    assert bool(jnp.array_equal(y1, ref1))

    # Larger input that exercises the multi-tile, double-buffered path
    # (rows=1024 -> tm=512 -> grid=(2,)).
    x2 = jax.random.normal(k2, (8, 1, 512, 256), dtype=jnp.float32)
    y2 = squeezer_forward(x2)
    jax.block_until_ready(y2)
    ref2 = jnp.squeeze(x2)
    assert y2.shape == ref2.shape == (8, 512, 256), y2.shape
    assert bool(jnp.array_equal(y2, ref2))

    # Degenerate cases: handled without a copy kernel (squeeze is metadata-only).
    x3 = jnp.zeros((0, 1, 4), dtype=jnp.float32)
    assert squeezer_forward(x3).shape == (0, 4)
    x4 = jnp.ones((1, 1, 1), dtype=jnp.float32)
    assert squeezer_forward(x4).shape == ()

    print("KERNEL_OK")
</pallas_src>

<mosaic_0001>
module attributes {stable_mosaic.version = 11 : i64} {
  func.func @_copy_kernel(%arg0: i32, %arg1: memref<4x1024xf32, #tpu.memory_space<vmem>>, %arg2: memref<4x1024xf32, #tpu.memory_space<vmem>>) attributes {dimension_semantics = [#tpu.dimension_semantics<parallel>], iteration_bounds = array<i64: 1>, scalar_prefetch = 0 : i64, scratch_operands = 0 : i64, tpu.core_type = #tpu.core_type<tc>, window_params = [{transform_indices = @transform_0, window_bounds = array<i64: 4, 1024>}, {transform_indices = @transform_1, window_bounds = array<i64: 4, 1024>}]} {
    %c0 = arith.constant 0 : index
    %c0_0 = arith.constant 0 : index
    %0 = vector.load %arg1[%c0, %c0_0] : memref<4x1024xf32, #tpu.memory_space<vmem>>, vector<4x1024xf32>
    %c0_1 = arith.constant 0 : index
    %c0_2 = arith.constant 0 : index
    %1 = vector.load %arg2[%c0_1, %c0_2] : memref<4x1024xf32, #tpu.memory_space<vmem>>, vector<4x1024xf32>
    tpu.vector_store %arg2[%c0_1, %c0_2], %0 {strides = array<i32>} : memref<4x1024xf32, #tpu.memory_space<vmem>>, vector<4x1024xf32>,
    return
  }
  func.func @transform_0(%arg0: i32) -> (i32, i32) {
    %c0_i32 = arith.constant 0 : i32
    %c0_i32_0 = arith.constant 0 : i32
    return %arg0, %c0_i32 : i32, i32
  }
  func.func @transform_1(%arg0: i32) -> (i32, i32) {
    %c0_i32 = arith.constant 0 : i32
    %c0_i32_0 = arith.constant 0 : i32
    return %arg0, %c0_i32 : i32, i32
  }
}

</mosaic_0001>

<llo_original>
// kernel: tpu_custom_call.1
$region0: #{tpu_custom_call.1}
  #allocation0 [shape = 'u32[]', space=smem, size = 0x4, offset = 0x4, fixed_abs, tag = 'smem constant byte address 0x4 - core index']
  #allocation1 [shape = 'u32[144,128]{1,0:T(1,128)}', space=vmem, size = 0x12000, scoped, tag = 'internal scratch']
  %s0 = inlined_call_operand.hbm [shape: f32[4,1024], index: 0, kind: input, shape index: {}]
  %s1 = inlined_call_operand.hbm [shape: f32[4,1024], index: 1, kind: output, shape index: {}]
  %s2 = sld [smem:[#allocation0]]
  $region18: #{tpu_custom_call.1} parent=0
    _
  %s4 = ssub.s32 1, %s2
  %s5 = scalar_select 0, %s4, %s2
  $region1: #{tpu_custom_call.1} parent=0
    #allocation2 [shape = 'u8[16384]{0}', space=vmem, size = 0x4000, scoped, tag = 'input window, operand 0, single buffered']
    #allocation3 [shape = 's32[1]{0}', space=sflag, size = 0x4, scoped, tag = 'scoped memory for tpu_custom_call.1']
    #allocation4 [shape = 's32[1]{0}', space=sflag, size = 0x4, scoped, tag = 'scoped memory for tpu_custom_call.1']
    #allocation5 [shape = 'u8[16384]{0}', space=vmem, size = 0x4000, scoped, tag = 'output window, operand 0, single buffered']
    %6 = vsyncpa [#allocation3], 0
    %7 = vsyncpa [#allocation4], 0
    // Predicated region
    $region2: #{tpu_custom_call.1} parent=1 // pred_check
      _
    $region3: #{tpu_custom_call.1} parent=1 // pred_check_branch
      %9 = sbr.rel (0) target = $region5
    $region4: #{tpu_custom_call.1} parent=1 // pred_region
      %s11 = ssub.s32 512, 512
      %12 = vsyncadd [#allocation3], %s11
      %s14 = sshll.u32 [#allocation2], 4
      %s15 = int_to_ptr.vmem [resolvable:$true] %s14
      %17 = dma.hbm_to_vmem [thread:$0]  %s0, 512, %s15, [#allocation3]
    $region5: #{tpu_custom_call.1} parent=1 // pred_fallthru
      _
    // Predicated region
    $region6: #{tpu_custom_call.1} parent=1 // pred_check
      _
    $region7: #{tpu_custom_call.1} parent=1 // pred_check_branch
      %19 = sbr.rel (0) target = $region9
    $region8: #{tpu_custom_call.1} parent=1 // pred_region
      %20 = dma.done [#allocation3], 512
    $region9: #{tpu_custom_call.1} parent=1 // pred_fallthru
      _
    %v21 = vld [vmem:[#allocation2] sm:$0xff]
    %v22 = vld [vmem:[#allocation2 + $0x8] sm:$0xff]
    %v23 = vld [vmem:[#allocation2 + $0x10] sm:$0xff]
    %v24 = vld [vmem:[#allocation2 + $0x18] sm:$0xff]
    %25 = vst [vmem:[#allocation5] sm:$0xff] %v21
    %26 = vst [vmem:[#allocation5 + $0x8] sm:$0xff] %v22
    %27 = vst [vmem:[#allocation5 + $0x10] sm:$0xff] %v23
    %28 = vst [vmem:[#allocation5 + $0x18] sm:$0xff] %v24
    // Predicated region
    $region10: #{tpu_custom_call.1} parent=1 // pred_check
      _
    $region11: #{tpu_custom_call.1} parent=1 // pred_check_branch
      %30 = sbr.rel (0) target = $region13
    $region12: #{tpu_custom_call.1} parent=1 // pred_region
      %s32 = ssub.s32 512, 512
      %33 = vsyncadd [#allocation4], %s32
      %s35 = sshll.u32 [#allocation5], 4
      %s36 = int_to_ptr.vmem [resolvable:$true] %s35
      %38 = dma.vmem_to_hbm [thread:$0]  %s36, 512, %s1, [#allocation4]
    $region13: #{tpu_custom_call.1} parent=1 // pred_fallthru
      _
    // Predicated region
    $region14: #{tpu_custom_call.1} parent=1 // pred_check
      _
    $region15: #{tpu_custom_call.1} parent=1 // pred_check_branch
      %40 = sbr.rel (0) target = $region17
    $region16: #{tpu_custom_call.1} parent=1 // pred_region
      %41 = dma.done [#allocation4], 512
    $region17: #{tpu_custom_call.1} parent=1 // pred_fallthru
      _
    %42 = vsyncpa [#allocation3], 1
    %43 = vsyncpa [#allocation4], 1

</llo_original>
